<compile_context>
chip_gen: v5e
topology: v5e:2x2
jax: 0.10.0
libtpu: 0.0.40
codegen_flags: <defaults>
</compile_context>

<pallas_src>
import numpy as np
import jax
import jax.numpy as jnp
from jax.experimental import pallas as pl
from jax.experimental.pallas import tpu as pltpu

# ----------------------------------------------------------------------------
# Shapes consistent with the module: forward(x) with x (batch, num_features);
# hidden/out dims fixed at 4 by the nn.Sequential.
# ----------------------------------------------------------------------------
B = 8                 # demo batch (sublane-aligned)
NUM_FEATURES = 32     # num_features
HID = 4               # Linear(num_features, 4)
OUT = 4               # Linear(4, 4)

# Packed-parameter slab layout (rows x 128 lanes, f32):
#   rows [0, 32)  : W1^T   (NUM_FEATURES, HID) in lanes [0, HID)
#   row  32       : b1     in lanes [0, HID)
#   rows [33, 37) : W2^T   (HID, OUT)          in lanes [0, OUT)
#   row  37       : b2     in lanes [0, OUT)
#   rows [38, 40) : zero padding (sublane alignment)
B1_ROW = NUM_FEATURES
W2_ROW = NUM_FEATURES + 1
B2_ROW = NUM_FEATURES + 1 + HID
P_ROWS = 40           # multiple of 8
P_LANES = 128         # lane-aligned

MAX_TB = 512          # max rows per grid step for the batched path


# ----------------------------------------------------------------------------
# Kernel: fused 2-layer MLP on one (TB, NUM_FEATURES) row block.
# ----------------------------------------------------------------------------
def _pf_mlp_kernel(x_ref, p_ref, o_ref):
    # In-kernel x.float() (matches the module's x.float()); VALU cast is free.
    x = x_ref[...].astype(jnp.float32)

    # Static slices of the packed parameter slab (views, no extra DMAs).
    w1t = p_ref[0:NUM_FEATURES, 0:HID]        # (F, HID)
    b1 = p_ref[B1_ROW:B1_ROW + 1, 0:HID]      # (1, HID)
    w2t = p_ref[W2_ROW:W2_ROW + HID, 0:OUT]   # (HID, OUT)
    b2 = p_ref[B2_ROW:B2_ROW + 1, 0:OUT]      # (1, OUT)

    # Layer 1 on the MXU: h = relu(x @ W1^T + b1)
    h = jnp.dot(x, w1t, preferred_element_type=jnp.float32) + b1
    h = jnp.maximum(h, 0.0)

    # Layer 2 on the VPU: unrolled K=4 broadcast FMAs (no second dependent
    # MXU->result-FIFO trip for a tiny (TB,4)@(4,4)).
    z = b2
    for k in range(HID):
        z = z + h[:, k:k + 1] * w2t[k:k + 1, :]

    o_ref[...] = jnp.maximum(z, 0.0)


# ----------------------------------------------------------------------------
# Wrappers
# ----------------------------------------------------------------------------
def prepare_params(params):
    """One-time parameter prep: pack pre-transposed weights + biases into a
    single lane-aligned f32 slab so the kernel takes exactly one param ref."""
    w1 = jnp.asarray(params['fc1.weight'], jnp.float32)   # (HID, F)
    b1 = jnp.asarray(params['fc1.bias'], jnp.float32)     # (HID,)
    w2 = jnp.asarray(params['fc2.weight'], jnp.float32)   # (OUT, HID)
    b2 = jnp.asarray(params['fc2.bias'], jnp.float32)     # (OUT,)

    slab = jnp.zeros((P_ROWS, P_LANES), jnp.float32)
    slab = slab.at[0:NUM_FEATURES, 0:HID].set(w1.T)
    slab = slab.at[B1_ROW, 0:HID].set(b1)
    slab = slab.at[W2_ROW:W2_ROW + HID, 0:OUT].set(w2.T)
    slab = slab.at[B2_ROW, 0:OUT].set(b2)
    return slab


@jax.jit
def pf_mlp_forward(x, param_slab):
    """Equivalent of PF_MLP.forward(x) for x of shape (batch, NUM_FEATURES),
    any input dtype (cast to f32 inside the kernel)."""
    b_in, f_in = x.shape
    assert f_in == NUM_FEATURES

    # Pad batch to a multiple of 8 (f32 sublane), then to a multiple of the
    # row-block size TB so the grid tiles evenly.
    b_pad8 = ((b_in + 7) // 8) * 8
    tb = min(b_pad8, MAX_TB)
    b_full = ((b_pad8 + tb - 1) // tb) * tb
    if b_full != b_in:
        x = jnp.pad(x, ((0, b_full - b_in), (0, 0)))

    grid = (b_full // tb,)
    # TODO(synk): for very large batches, emit a lane-padded (tb, 128) output
    # slab (slice to OUT=4 in the wrapper) to avoid masked narrow stores.
    out = pl.pallas_call(
        _pf_mlp_kernel,
        out_shape=jax.ShapeDtypeStruct((b_full, OUT), jnp.float32),
        grid_spec=pltpu.PrefetchScalarGridSpec(
            num_scalar_prefetch=0,
            grid=grid,
            in_specs=[
                pl.BlockSpec((tb, NUM_FEATURES), lambda i: (i, 0)),
                pl.BlockSpec((P_ROWS, P_LANES), lambda i: (0, 0)),  # resident
            ],
            out_specs=pl.BlockSpec((tb, OUT), lambda i: (i, 0)),
        ),
        compiler_params=pltpu.CompilerParams(
            dimension_semantics=("parallel",)),   # v7x: shard rows over 2 TCs
    )(x, param_slab)
    return out[:b_in]


# ----------------------------------------------------------------------------
# Deterministic init (PyTorch-style uniform(-1/sqrt(fan_in), 1/sqrt(fan_in)))
# and a pure-JAX reference for verification.
# ----------------------------------------------------------------------------
def init_params(key):
    k1, k2, k3, k4 = jax.random.split(key, 4)
    s1 = 1.0 / np.sqrt(NUM_FEATURES)
    s2 = 1.0 / np.sqrt(HID)
    u = lambda k, shape, s: jax.random.uniform(k, shape, jnp.float32, -s, s)
    return {
        'fc1.weight': u(k1, (HID, NUM_FEATURES), s1),
        'fc1.bias':   u(k2, (HID,), s1),
        'fc2.weight': u(k3, (OUT, HID), s2),
        'fc2.bias':   u(k4, (OUT,), s2),
    }


def reference_forward(x, params):
    x_f = x.astype(jnp.float32)
    h = jax.nn.relu(x_f @ params['fc1.weight'].T + params['fc1.bias'])
    return jax.nn.relu(h @ params['fc2.weight'].T + params['fc2.bias'])


if __name__ == "__main__":
    key = jax.random.PRNGKey(0)
    kx, kp = jax.random.split(key)

    params = init_params(kp)
    slab = prepare_params(params)   # one-time prep, hoisted out of the hot path

    # Small case (B=8), f32 input.
    x = jax.random.normal(kx, (B, NUM_FEATURES), jnp.float32)
    out = pf_mlp_forward(x, slab)
    jax.block_until_ready(out)
    out_ref = reference_forward(x, params)
    assert out.shape == (B, OUT)
    assert np.allclose(np.asarray(out), np.asarray(out_ref), rtol=1e-5, atol=1e-5)

    # Exercise the gridded / padded path: non-multiple-of-8 batch, bf16 input
    # (in-kernel cast), grid > 1, "parallel" row axis.
    xb = jax.random.normal(jax.random.PRNGKey(1), (1028, NUM_FEATURES),
                           jnp.bfloat16)
    outb = pf_mlp_forward(xb, slab)
    jax.block_until_ready(outb)
    outb_ref = reference_forward(xb, params)
    assert outb.shape == (1028, OUT)
    assert np.allclose(np.asarray(outb), np.asarray(outb_ref),
                       rtol=1e-5, atol=1e-5)

    print("KERNEL_OK")
</pallas_src>

<mosaic_0001>
module attributes {stable_mosaic.version = 11 : i64} {
  func.func @_pf_mlp_kernel(%arg0: i32, %arg1: memref<8x32xf32, #tpu.memory_space<vmem>>, %arg2: memref<40x128xf32, #tpu.memory_space<vmem>>, %arg3: memref<8x4xf32, #tpu.memory_space<vmem>>) attributes {dimension_semantics = [#tpu.dimension_semantics<parallel>], iteration_bounds = array<i64: 1>, scalar_prefetch = 0 : i64, scratch_operands = 0 : i64, tpu.core_type = #tpu.core_type<tc>, window_params = [{transform_indices = @transform_0, window_bounds = array<i64: 8, 32>}, {pipeline_mode = #tpu.pipeline_mode<synchronous>, transform_indices = @transform_1, window_bounds = array<i64: 40, 128>}, {transform_indices = @transform_2, window_bounds = array<i64: 8, 4>}]} {
    %c0 = arith.constant 0 : index
    %c0_0 = arith.constant 0 : index
    %0 = vector.load %arg1[%c0, %c0_0] : memref<8x32xf32, #tpu.memory_space<vmem>>, vector<8x32xf32>
    %c0_1 = arith.constant 0 : index
    %c0_2 = arith.constant 0 : index
    %1 = vector.load %arg2[%c0_1, %c0_2] : memref<40x128xf32, #tpu.memory_space<vmem>>, vector<32x4xf32>
    %c32 = arith.constant 32 : index
    %c0_3 = arith.constant 0 : index
    %2 = vector.load %arg2[%c32, %c0_3] : memref<40x128xf32, #tpu.memory_space<vmem>>, vector<1x4xf32>
    %c33 = arith.constant 33 : index
    %c0_4 = arith.constant 0 : index
    %3 = vector.load %arg2[%c33, %c0_4] : memref<40x128xf32, #tpu.memory_space<vmem>>, vector<4x4xf32>
    %c37 = arith.constant 37 : index
    %c0_5 = arith.constant 0 : index
    %4 = vector.load %arg2[%c37, %c0_5] : memref<40x128xf32, #tpu.memory_space<vmem>>, vector<1x4xf32>
    %cst = arith.constant dense<0.000000e+00> : vector<8x4xf32>
    %5 = tpu.matmul %0, %1, %cst {dimension_numbers = #tpu.dot_dimension_numbers<[1], [0], [0], [1], [0, 0, 1, 1], [], []>} : vector<8x32xf32>, vector<32x4xf32>, vector<8x4xf32> -> vector<8x4xf32>
    %6 = vector.broadcast %2 : vector<1x4xf32> to vector<8x4xf32>
    %7 = arith.addf %5, %6 : vector<8x4xf32>
    %cst_6 = arith.constant 0.000000e+00 : f32
    %8 = vector.broadcast %cst_6 : f32 to vector<8x4xf32>
    %9 = arith.maximumf %7, %8 : vector<8x4xf32>
    %10 = vector.extract_strided_slice %9 {offsets = [0, 0], sizes = [8, 1], strides = [1, 1]} : vector<8x4xf32> to vector<8x1xf32>
    %11 = vector.extract_strided_slice %3 {offsets = [0, 0], sizes = [1, 4], strides = [1, 1]} : vector<4x4xf32> to vector<1x4xf32>
    %12 = vector.broadcast %10 : vector<8x1xf32> to vector<8x4xf32>
    %13 = vector.broadcast %11 : vector<1x4xf32> to vector<8x4xf32>
    %14 = arith.mulf %12, %13 : vector<8x4xf32>
    %15 = vector.broadcast %4 : vector<1x4xf32> to vector<8x4xf32>
    %16 = arith.addf %15, %14 : vector<8x4xf32>
    %17 = vector.extract_strided_slice %9 {offsets = [0, 1], sizes = [8, 1], strides = [1, 1]} : vector<8x4xf32> to vector<8x1xf32>
    %18 = vector.extract_strided_slice %3 {offsets = [1, 0], sizes = [1, 4], strides = [1, 1]} : vector<4x4xf32> to vector<1x4xf32>
    %19 = vector.broadcast %17 : vector<8x1xf32> to vector<8x4xf32>
    %20 = vector.broadcast %18 : vector<1x4xf32> to vector<8x4xf32>
    %21 = arith.mulf %19, %20 : vector<8x4xf32>
    %22 = arith.addf %16, %21 : vector<8x4xf32>
    %23 = vector.extract_strided_slice %9 {offsets = [0, 2], sizes = [8, 1], strides = [1, 1]} : vector<8x4xf32> to vector<8x1xf32>
    %24 = vector.extract_strided_slice %3 {offsets = [2, 0], sizes = [1, 4], strides = [1, 1]} : vector<4x4xf32> to vector<1x4xf32>
    %25 = vector.broadcast %23 : vector<8x1xf32> to vector<8x4xf32>
    %26 = vector.broadcast %24 : vector<1x4xf32> to vector<8x4xf32>
    %27 = arith.mulf %25, %26 : vector<8x4xf32>
    %28 = arith.addf %22, %27 : vector<8x4xf32>
    %29 = vector.extract_strided_slice %9 {offsets = [0, 3], sizes = [8, 1], strides = [1, 1]} : vector<8x4xf32> to vector<8x1xf32>
    %30 = vector.extract_strided_slice %3 {offsets = [3, 0], sizes = [1, 4], strides = [1, 1]} : vector<4x4xf32> to vector<1x4xf32>
    %31 = vector.broadcast %29 : vector<8x1xf32> to vector<8x4xf32>
    %32 = vector.broadcast %30 : vector<1x4xf32> to vector<8x4xf32>
    %33 = arith.mulf %31, %32 : vector<8x4xf32>
    %34 = arith.addf %28, %33 : vector<8x4xf32>
    %cst_7 = arith.constant 0.000000e+00 : f32
    %35 = vector.broadcast %cst_7 : f32 to vector<8x4xf32>
    %36 = arith.maximumf %34, %35 : vector<8x4xf32>
    %c0_8 = arith.constant 0 : index
    %c0_9 = arith.constant 0 : index
    %37 = vector.load %arg3[%c0_8, %c0_9] : memref<8x4xf32, #tpu.memory_space<vmem>>, vector<8x4xf32>
    tpu.vector_store %arg3[%c0_8, %c0_9], %36 {strides = array<i32>} : memref<8x4xf32, #tpu.memory_space<vmem>>, vector<8x4xf32>,
    return
  }
  func.func @transform_0(%arg0: i32) -> (i32, i32) {
    %c0_i32 = arith.constant 0 : i32
    %c0_i32_0 = arith.constant 0 : i32
    return %arg0, %c0_i32 : i32, i32
  }
  func.func @transform_1(%arg0: i32) -> (i32, i32) {
    %c0_i32 = arith.constant 0 : i32
    %c0_i32_0 = arith.constant 0 : i32
    %c0_i32_1 = arith.constant 0 : i32
    return %c0_i32, %c0_i32_0 : i32, i32
  }
  func.func @transform_2(%arg0: i32) -> (i32, i32) {
    %c0_i32 = arith.constant 0 : i32
    %c0_i32_0 = arith.constant 0 : i32
    return %arg0, %c0_i32 : i32, i32
  }
}

</mosaic_0001>

<llo_original>
// kernel: pf_mlp_forward.1
$region0: #{pf_mlp_forward.1}
  #allocation0 [shape = 'u32[]', space=smem, size = 0x4, offset = 0x4, fixed_abs, tag = 'smem constant byte address 0x4 - core index']
  #allocation1 [shape = 'u32[72,128]{1,0:T(1,128)}', space=vmem, size = 0x9000, scoped, tag = 'internal scratch']
  %s0 = inlined_call_operand.hbm [shape: f32[8,32], index: 0, kind: input, shape index: {}]
  %s1 = inlined_call_operand.hbm [shape: f32[40,128], index: 1, kind: input, shape index: {}]
  %s2 = inlined_call_operand.vmem [shape: f32[8,4], index: 2, kind: output, shape index: {}]
  %s3 = sld [smem:[#allocation0]]
  $region26: #{pf_mlp_forward.1} parent=0
    _
  %s5 = ssub.s32 1, %s3
  %s6 = scalar_select 0, %s5, %s3
  $region1: #{pf_mlp_forward.1} parent=0
    #allocation2 [shape = 'u8[4096]{0}', space=vmem, size = 0x1000, scoped, tag = 'input window, operand 0, single buffered']
    #allocation3 [shape = 's32[1]{0}', space=sflag, size = 0x4, scoped, tag = 'scoped memory for pf_mlp_forward.1']
    #allocation4 [shape = 'u8[20480]{0}', space=vmem, size = 0x5000, scoped, tag = 'input window, operand 1, single buffered']
    #allocation5 [shape = 's32[1]{0}', space=sflag, size = 0x4, scoped, tag = 'scoped memory for pf_mlp_forward.1']
    %7 = vsyncpa [#allocation3], 0
    %8 = vsyncpa [#allocation5], 0
    // Predicated region
    $region2: #{pf_mlp_forward.1} parent=1 // pred_check
      _
    $region3: #{pf_mlp_forward.1} parent=1 // pred_check_branch
      %10 = sbr.rel (0) target = $region5
    $region4: #{pf_mlp_forward.1} parent=1 // pred_region
      %12 = vsyncadd [#allocation3], 0
      %s14 = sshll.u32 %s0, 4
      %s15 = int_to_ptr.hbm [resolvable:$true] %s14
      %s16 = sshll.u32 [#allocation2], 4
      %s17 = int_to_ptr.vmem [resolvable:$true] %s16
      %19 = dma.hbm_to_vmem [thread:$0]  %s15, 128, %s17, [#allocation3]
    $region5: #{pf_mlp_forward.1} parent=1 // pred_fallthru
      _
    // Predicated region
    $region6: #{pf_mlp_forward.1} parent=1 // pred_check
      _
    $region7: #{pf_mlp_forward.1} parent=1 // pred_check_branch
      %21 = sbr.rel (0) target = $region9
    $region8: #{pf_mlp_forward.1} parent=1 // pred_region
      %23 = vsyncadd [#allocation5], 0
      %s24 = sshll.u32 %s1, 4
      %s25 = int_to_ptr.hbm [resolvable:$true] %s24
      %s26 = sshll.u32 [#allocation4], 4
      %s27 = int_to_ptr.vmem [resolvable:$true] %s26
      %32 = dma.hbm_to_vmem [thread:$0]  %s25, 640, %s27, [#allocation5], 128, 128, 8
    $region9: #{pf_mlp_forward.1} parent=1 // pred_fallthru
      _
    // Predicated region
    $region10: #{pf_mlp_forward.1} parent=1 // pred_check
      _
    $region11: #{pf_mlp_forward.1} parent=1 // pred_check_branch
      %34 = sbr.rel (0) target = $region13
    $region12: #{pf_mlp_forward.1} parent=1 // pred_region
      %36 = dma.done [#allocation3], 128
    $region13: #{pf_mlp_forward.1} parent=1 // pred_fallthru
      _
    // Predicated region
    $region14: #{pf_mlp_forward.1} parent=1 // pred_check
      _
    $region15: #{pf_mlp_forward.1} parent=1 // pred_check_branch
      %38 = sbr.rel (0) target = $region17
    $region16: #{pf_mlp_forward.1} parent=1 // pred_region
      %40 = dma.done [#allocation5], 640
    $region17: #{pf_mlp_forward.1} parent=1 // pred_fallthru
      _
    %v41 = vld [vmem:[#allocation2] sm:$0xff]
    %v42 = vld [vmem:[#allocation4] sm:$0xff]
    %v43 = vld [vmem:[#allocation4 + $0x8] sm:$0xff]
    %v44 = vld [vmem:[#allocation4 + $0x10] sm:$0xff]
    %v45 = vld [vmem:[#allocation4 + $0x18] sm:$0xff]
    %v46 = vld [vmem:[#allocation4 + $0x20] sm:$0x1]
    %v47 = vld [vmem:[#allocation4 + $0x21] sm:$0xf]
    %v48 = vld [vmem:[#allocation4 + $0x25] sm:$0x1]
    %v49 = vperm.slane %v46, 0
    %vm50 = vcmask 261120
    %v52 = vsel %vm50, %v41, 0
    %54 = vmatpush.msra.mxu0 0.0
    %55 = vmatpush.msra.mxu0 0.0
    %56 = vmatpush.msra.mxu0 0.0
    %57 = vmatpush.msra.mxu0 0.0
    %58 = vmatpush.msra.mxu0 0.0
    %59 = vmatpush.msra.mxu0 0.0
    %60 = vmatpush.msra.mxu0 0.0
    %61 = vmatpush.msra.mxu0 0.0
    %62 = vmatpush.msra.mxu0 0.0
    %63 = vmatpush.msra.mxu0 0.0
    %64 = vmatpush.msra.mxu0 0.0
    %65 = vmatpush.msra.mxu0 0.0
    %66 = vmatpush.msra.mxu0 %v45
    %67 = vmatpush.msra.mxu0 %v44
    %68 = vmatpush.msra.mxu0 %v43
    %69 = vmatpush.msra.mxu0 %v42
    %70 = vmatmul.f32.gmra.mxu0 %v52
    %v71 = vpop.f32.mrf.mxu0
    %v72 = vadd.f32 %v49, %v71
    %73 = vdwg.mxu0
    %v74 = vmax.f32 %v72, 0.0
    %76 = vset.pattern.permute.xlu0 0
    %77 = vperm.xlu0 %76, %v74
    %v78 = vpop.permute.xlu0 %77
    %v80 = vperm.slane %v47, 0
    %v81 = vmul.f32 %v78, %v80
    %v82 = vperm.slane %v48, 0
    %v83 = vadd.f32 %v82, %v81
    %84 = vset.pattern.permute.xlu0 1
    %85 = vperm.xlu0 %84, %v74
    %v86 = vpop.permute.xlu0 %85
    %v88 = vperm.slane %v47, 1
    %v89 = vmul.f32 %v86, %v88
    %v90 = vadd.f32 %v83, %v89
    %91 = vset.pattern.permute.xlu0 2
    %92 = vperm.xlu0 %91, %v74
    %v93 = vpop.permute.xlu0 %92
    %v95 = vperm.slane %v47, 2
    %v96 = vmul.f32 %v93, %v95
    %v97 = vadd.f32 %v90, %v96
    %98 = vset.pattern.permute.xlu0 3
    %99 = vperm.xlu0 %98, %v74
    %v100 = vpop.permute.xlu0 %99
    %v102 = vperm.slane %v47, 3
    %v103 = vmul.f32 %v100, %v102
    %v104 = vadd.f32 %v97, %v103
    %v105 = vmax.f32 %v104, 0.0
    %vm106 = vcmask 31744
    %107 = vst.msk [vmem:[%s2] sm:$0xff] %vm106, %v105
    // Predicated region
    $region18: #{pf_mlp_forward.1} parent=1 // pred_check
      _
    $region19: #{pf_mlp_forward.1} parent=1 // pred_check_branch
      %109 = sbr.rel (0) target = $region21
    $region20: #{pf_mlp_forward.1} parent=1 // pred_region
      _
    $region21: #{pf_mlp_forward.1} parent=1 // pred_fallthru
      _
    // Predicated region
    $region22: #{pf_mlp_forward.1} parent=1 // pred_check
      _
    $region23: #{pf_mlp_forward.1} parent=1 // pred_check_branch
      %111 = sbr.rel (0) target = $region25
    $region24: #{pf_mlp_forward.1} parent=1 // pred_region
      _
    $region25: #{pf_mlp_forward.1} parent=1 // pred_fallthru
      _
    %112 = vsyncpa [#allocation3], 1
    %113 = vsyncpa [#allocation5], 1

</llo_original>
